<compile_context>
chip_gen: v7x
topology: tpu7x:2x2x1
jax: 0.10.0
libtpu: 0.0.40
codegen_flags: <defaults>
</compile_context>

<pallas_src>
import functools

import jax
import jax.numpy as jnp
from jax.experimental import pallas as pl
from jax.experimental.pallas import tpu as pltpu

_EPS = 1e-5
_LANE = 128
_SUBLANE = 8


# ------------------------------- helpers ------------------------------------
def _round_up(n, m):
    return ((n + m - 1) // m) * m


def _gen_config():
    """Generation-aware VMEM budgeting (v5e/v6e: 128 MiB, v7x: 64 MiB per TC)."""
    cap = 64 << 20  # conservative default (v7x per-TensorCore)
    try:
        info = pltpu.get_tpu_info()
        c = getattr(info, "vmem_capacity_bytes", None)
        if c:
            cap = int(c)
    except Exception:
        pass
    if cap >= (128 << 20):
        return {"budget": 96 << 20, "row_cap": 1024, "vmem_cap": cap}
    return {"budget": 40 << 20, "row_cap": 512, "vmem_cap": cap}


def _pick_tile_rows(rows, padded_d, itemsize, budget, row_cap):
    """Largest row tile (multiple of 8, <= row_cap) whose double-buffered LHS fits."""
    tm = (budget // (2 * padded_d * itemsize)) // _SUBLANE * _SUBLANE
    tm = max(_SUBLANE, min(row_cap, tm))
    tm = min(tm, _round_up(rows, _SUBLANE))
    return int(tm)


def _pad2d(x2, rp, dp):
    """Zero-pad a 2-D array; pass through (no HBM copy) when already aligned."""
    r, d = x2.shape
    if r == rp and d == dp:
        return x2
    return jnp.zeros((rp, dp), x2.dtype).at[:r, :d].set(x2)


def _pad_vec_row(v, dp, dtype):
    v = v.astype(dtype)
    d = v.shape[0]
    if d == dp:
        return v.reshape(1, dp)
    return jnp.zeros((1, dp), dtype).at[0, :d].set(v)


def _vmem_limit(cfg, footprint):
    return int(max(16 << 20,
                   min(cfg["vmem_cap"] - (8 << 20),
                       max(cfg["budget"], footprint + (4 << 20)))))


def _ln_rows(x, g, b, inv_d):
    """LayerNorm over the lanes of a (rows, Dp) f32 tile.

    Lanes >= D are zero in x, gamma and beta, so the sum-based mean/var are
    unaffected by padding and padded output lanes come out 0.
    Matches torch.nn.LayerNorm: biased variance, eps=1e-5.
    """
    mean = jnp.sum(x, axis=-1, keepdims=True) * inv_d
    sumsq = jnp.sum(x * x, axis=-1, keepdims=True) * inv_d
    var = jnp.maximum(sumsq - mean * mean, 0.0)
    inv = jax.lax.rsqrt(var + _EPS)
    return (x - mean) * inv * g + b


# ------------------- fused LayerNorm + Linear kernel -------------------------
def _prenorm_linear_kernel(x_ref, g_ref, b_ref, w_ref, bias_ref, o_ref, y_ref,
                           *, inv_d):
    # LayerNorm prologue runs ONCE per row tile (j == 0) and is cached in VMEM;
    # every output-column tile reuses it (requires j axis = "arbitrary").
    @pl.when(pl.program_id(1) == 0)
    def _():
        x = x_ref[...].astype(jnp.float32)
        y = _ln_rows(x, g_ref[...].astype(jnp.float32),
                     b_ref[...].astype(jnp.float32), inv_d)
        y_ref[...] = y.astype(y_ref.dtype)

    acc = jnp.dot(y_ref[...], w_ref[...], preferred_element_type=jnp.float32)
    o_ref[...] = (acc + bias_ref[...].astype(jnp.float32)).astype(o_ref.dtype)


def prenorm_linear(x, gamma, beta, w, bias):
    """Fused fn(LayerNorm(x)) with fn = Linear(w, bias): one pallas_call."""
    orig_shape = x.shape
    D = orig_shape[-1]
    Dout = w.shape[1]
    x2 = x.reshape(-1, D)
    R = x2.shape[0]

    cfg = _gen_config()
    Dp = _round_up(D, _LANE)        # lane-dense LN / K axis
    Np = _round_up(Dout, _LANE)     # lane-dense output axis

    xb = jnp.dtype(x.dtype).itemsize
    wb = jnp.dtype(w.dtype).itemsize
    ob = jnp.dtype(x.dtype).itemsize

    tm = _pick_tile_rows(R, Dp, xb, cfg["budget"] // 3, cfg["row_cap"])

    def footprint(tm_, tn_):
        return (2 * tm_ * Dp * xb            # x tile (double-buffered)
                + 2 * Dp * tn_ * wb          # W slab (double-buffered)
                + 2 * tm_ * tn_ * ob         # out tile (double-buffered)
                + tm_ * Dp * wb              # cached LayerNorm output
                + 4 * Dp * 4 + 2 * tn_ * 4)  # gamma/beta/bias

    # Prefer a resident weight (tn = Np, single j step); otherwise MXU tiles.
    tn_opts = [Np]
    if Np % 256 == 0 and 256 < Np:
        tn_opts.append(256)
    if 128 < Np:
        tn_opts.append(128)

    tn = tn_opts[-1]
    while True:
        found = False
        for cand in tn_opts:              # shrink tn before tm (v7x VMEM)
            if footprint(tm, cand) <= cfg["budget"]:
                tn, found = cand, True
                break
        if found or tm <= _SUBLANE:
            break
        tm = max(_SUBLANE, (tm // 2) // _SUBLANE * _SUBLANE)

    Rp = _round_up(R, tm)

    xp = _pad2d(x2, Rp, Dp)
    gp = _pad_vec_row(gamma, Dp, jnp.float32)
    bp = _pad_vec_row(beta, Dp, jnp.float32)
    wp = _pad2d(w, Dp, Np)
    biasp = _pad_vec_row(bias, Np, jnp.float32)

    out = pl.pallas_call(
        functools.partial(_prenorm_linear_kernel, inv_d=1.0 / D),
        out_shape=jax.ShapeDtypeStruct((Rp, Np), x.dtype),
        grid_spec=pltpu.PrefetchScalarGridSpec(
            num_scalar_prefetch=0,
            grid=(Rp // tm, Np // tn),
            in_specs=[
                pl.BlockSpec((tm, Dp), lambda i, j: (i, 0)),
                pl.BlockSpec((1, Dp), lambda i, j: (0, 0)),
                pl.BlockSpec((1, Dp), lambda i, j: (0, 0)),
                pl.BlockSpec((Dp, tn), lambda i, j: (0, j)),
                pl.BlockSpec((1, tn), lambda i, j: (0, j)),
            ],
            out_specs=pl.BlockSpec((tm, tn), lambda i, j: (i, j)),
            scratch_shapes=[pltpu.VMEM((tm, Dp), w.dtype)],
        ),
        compiler_params=pltpu.CompilerParams(
            # j MUST be "arbitrary": the cached LN scratch is only valid if the
            # core owning a row tile sweeps its j range starting at j == 0.
            dimension_semantics=("parallel", "arbitrary"),
            vmem_limit_bytes=_vmem_limit(cfg, footprint(tm, tn))),
    )(xp, gp, bp, wp, biasp)

    if Rp != R or Np != Dout:
        out = out[:R, :Dout]
    return out.reshape(orig_shape[:-1] + (Dout,))


# ------------------------ standalone LayerNorm kernel ------------------------
# Used for the generic PreNorm path (arbitrary `fn`).
def _layernorm_kernel(x_ref, g_ref, b_ref, o_ref, *, inv_d):
    x = x_ref[...].astype(jnp.float32)
    y = _ln_rows(x, g_ref[...].astype(jnp.float32),
                 b_ref[...].astype(jnp.float32), inv_d)
    o_ref[...] = y.astype(o_ref.dtype)


def layernorm(x, gamma, beta):
    orig_shape = x.shape
    D = orig_shape[-1]
    x2 = x.reshape(-1, D)
    R = x2.shape[0]

    cfg = _gen_config()
    Dp = _round_up(D, _LANE)
    xb = jnp.dtype(x.dtype).itemsize
    tm = _pick_tile_rows(R, Dp, xb, cfg["budget"] // 2, cfg["row_cap"])
    Rp = _round_up(R, tm)

    xp = _pad2d(x2, Rp, Dp)
    gp = _pad_vec_row(gamma, Dp, jnp.float32)
    bp = _pad_vec_row(beta, Dp, jnp.float32)

    out = pl.pallas_call(
        functools.partial(_layernorm_kernel, inv_d=1.0 / D),
        out_shape=jax.ShapeDtypeStruct((Rp, Dp), x.dtype),
        grid_spec=pltpu.PrefetchScalarGridSpec(
            num_scalar_prefetch=0,
            grid=(Rp // tm,),
            in_specs=[
                pl.BlockSpec((tm, Dp), lambda i: (i, 0)),
                pl.BlockSpec((1, Dp), lambda i: (0, 0)),
                pl.BlockSpec((1, Dp), lambda i: (0, 0)),
            ],
            out_specs=pl.BlockSpec((tm, Dp), lambda i: (i, 0)),
        ),
        compiler_params=pltpu.CompilerParams(
            dimension_semantics=("parallel",),
            vmem_limit_bytes=_vmem_limit(cfg, 4 * tm * Dp * max(xb, 4))),
    )(xp, gp, bp)
    if Rp != R or Dp != D:
        out = out[:R, :D]
    return out.reshape(orig_shape)


# ---------------------------- tiled Linear kernel ----------------------------
def _linear_kernel(x_ref, w_ref, bias_ref, o_ref, acc_ref):
    @pl.when(pl.program_id(2) == 0)
    def _():
        acc_ref[...] = jnp.zeros_like(acc_ref)

    acc_ref[...] += jnp.dot(x_ref[...], w_ref[...],
                            preferred_element_type=jnp.float32)

    @pl.when(pl.program_id(2) == pl.num_programs(2) - 1)
    def _():
        o_ref[...] = (acc_ref[...] + bias_ref[...].astype(jnp.float32)
                      ).astype(o_ref.dtype)


def linear(x, w, b):
    """x: (..., Din), w: (Din, Dout), b: (Dout,) -> (..., Dout)."""
    orig_shape = x.shape
    Din = orig_shape[-1]
    Dout = w.shape[1]
    x2 = x.reshape(-1, Din)
    R = x2.shape[0]

    cfg = _gen_config()
    Kp = _round_up(Din, _LANE)
    Np = _round_up(Dout, _LANE)
    xb = jnp.dtype(x.dtype).itemsize
    wb = jnp.dtype(w.dtype).itemsize
    ob = jnp.dtype(x.dtype).itemsize

    tm = _pick_tile_rows(R, Kp, xb, cfg["budget"] // 3, cfg["row_cap"])

    def opts(full):
        o = [full]
        if full % 256 == 0 and 256 < full:
            o.append(256)
        if 128 < full:
            o.append(128)
        return o

    def footprint(tm_, tn_, tk_):
        return (2 * tm_ * tk_ * xb + 2 * tk_ * tn_ * wb + 2 * tm_ * tn_ * ob
                + tm_ * tn_ * 4 + 2 * tn_ * 4)

    tn_opts, tk_opts = opts(Np), opts(Kp)
    tn, tk = tn_opts[-1], tk_opts[-1]
    while True:
        found = False
        for cand_n in tn_opts:            # shrink tiles before tm
            for cand_k in tk_opts:
                if footprint(tm, cand_n, cand_k) <= cfg["budget"]:
                    tn, tk, found = cand_n, cand_k, True
                    break
            if found:
                break
        if found or tm <= _SUBLANE:
            break
        tm = max(_SUBLANE, (tm // 2) // _SUBLANE * _SUBLANE)

    Rp = _round_up(R, tm)

    xp = _pad2d(x2, Rp, Kp)
    wp = _pad2d(w, Kp, Np)
    bp = _pad_vec_row(b, Np, jnp.float32)

    out = pl.pallas_call(
        _linear_kernel,
        out_shape=jax.ShapeDtypeStruct((Rp, Np), x.dtype),
        grid_spec=pltpu.PrefetchScalarGridSpec(
            num_scalar_prefetch=0,
            grid=(Rp // tm, Np // tn, Kp // tk),
            in_specs=[
                pl.BlockSpec((tm, tk), lambda i, j, k: (i, k)),
                pl.BlockSpec((tk, tn), lambda i, j, k: (k, j)),
                pl.BlockSpec((1, tn), lambda i, j, k: (0, j)),
            ],
            out_specs=pl.BlockSpec((tm, tn), lambda i, j, k: (i, j)),
            scratch_shapes=[pltpu.VMEM((tm, tn), jnp.float32)],
        ),
        compiler_params=pltpu.CompilerParams(
            dimension_semantics=("parallel", "parallel", "arbitrary"),
            vmem_limit_bytes=_vmem_limit(cfg, footprint(tm, tn, tk))),
    )(xp, wp, bp)
    if Rp != R or Np != Dout:
        out = out[:R, :Dout]
    return out.reshape(orig_shape[:-1] + (Dout,))


# --------------------------------- modules -----------------------------------
class Linear:
    """Pallas-backed Linear layer (used as PreNorm's inner `fn` in the demo)."""

    def __init__(self, w, b):
        self.w = w
        self.b = b

    def __call__(self, x):
        return linear(x, self.w, self.b)


class PreNorm:
    """JAX/Pallas equivalent of the PyTorch PreNorm module."""

    def __init__(self, dim, fn):
        # nn.LayerNorm(dim): weight=ones, bias=zeros (deterministic init)
        self.gamma = jnp.ones((dim,), jnp.float32)
        self.beta = jnp.zeros((dim,), jnp.float32)
        self.fn = fn

    def __call__(self, x, **kwargs):
        if isinstance(self.fn, Linear) and not kwargs:
            # Fused LayerNorm + Linear: single pallas_call, no HBM round-trip.
            return prenorm_linear(x, self.gamma, self.beta, self.fn.w, self.fn.b)
        # Generic path for arbitrary `fn`: Pallas LayerNorm, then fn.
        return self.fn(layernorm(x, self.gamma, self.beta), **kwargs)


# ----------------------------------- demo ------------------------------------
if __name__ == "__main__":
    key = jax.random.PRNGKey(0)
    k_x, k_w, k_b = jax.random.split(key, 3)

    B, S, D = 2, 8, 32                       # small shapes; LayerNorm over D
    x = jax.random.normal(k_x, (B, S, D), dtype=jnp.float32)

    # Deterministic inner fn: Linear(D -> D) driven by Pallas kernels.
    w = jax.random.normal(k_w, (D, D), dtype=jnp.float32) * 0.02
    b = jax.random.normal(k_b, (D,), dtype=jnp.float32) * 0.02
    fn = Linear(w, b)

    module = PreNorm(D, fn)

    # Fused path (LayerNorm + Linear in one kernel).
    out = jax.block_until_ready(module(x))

    # Generic (unfused) path: standalone Pallas LayerNorm, then Pallas Linear.
    out_unfused = jax.block_until_ready(fn(layernorm(x, module.gamma, module.beta)))

    # Reference check in plain JAX (same math as torch LayerNorm + Linear).
    mean = jnp.mean(x, axis=-1, keepdims=True)
    var = jnp.mean((x - mean) ** 2, axis=-1, keepdims=True)
    x_ln = (x - mean) * jax.lax.rsqrt(var + _EPS) * module.gamma + module.beta
    ref = x_ln @ w + b

    assert out.shape == (B, S, D)
    assert jnp.allclose(out, ref, atol=1e-4, rtol=1e-4)
    assert jnp.allclose(out_unfused, ref, atol=1e-4, rtol=1e-4)

    print("KERNEL_OK")
</pallas_src>

<mosaic_0001>
module attributes {stable_mosaic.version = 11 : i64} {
  func.func @_prenorm_linear_kernel(%arg0: i32, %arg1: i32, %arg2: memref<16x128xf32, #tpu.memory_space<vmem>>, %arg3: memref<1x128xf32, #tpu.memory_space<vmem>>, %arg4: memref<1x128xf32, #tpu.memory_space<vmem>>, %arg5: memref<128x128xf32, #tpu.memory_space<vmem>>, %arg6: memref<1x128xf32, #tpu.memory_space<vmem>>, %arg7: memref<16x128xf32, #tpu.memory_space<vmem>>, %arg8: memref<16x128xf32, #tpu.memory_space<vmem>>) attributes {dimension_semantics = [#tpu.dimension_semantics<parallel>, #tpu.dimension_semantics<arbitrary>], iteration_bounds = array<i64: 1, 1>, scalar_prefetch = 0 : i64, scratch_operands = 1 : i64, tpu.core_type = #tpu.core_type<tc>, window_params = [{transform_indices = @transform_0, window_bounds = array<i64: 16, 128>}, {pipeline_mode = #tpu.pipeline_mode<synchronous>, transform_indices = @transform_1, window_bounds = array<i64: 1, 128>}, {pipeline_mode = #tpu.pipeline_mode<synchronous>, transform_indices = @transform_2, window_bounds = array<i64: 1, 128>}, {transform_indices = @transform_3, window_bounds = array<i64: 128, 128>}, {transform_indices = @transform_4, window_bounds = array<i64: 1, 128>}, {transform_indices = @transform_5, window_bounds = array<i64: 16, 128>}]} {
    %c0_i32 = arith.constant 0 : i32
    %0 = arith.cmpi eq, %arg1, %c0_i32 : i32
    %1 = arith.extui %0 : i1 to i32
    %c0_i32_0 = arith.constant 0 : i32
    %2 = arith.cmpi ne, %1, %c0_i32_0 : i32
    scf.if %2 {
      %c0_8 = arith.constant 0 : index
      %c0_9 = arith.constant 0 : index
      %10 = vector.load %arg2[%c0_8, %c0_9] : memref<16x128xf32, #tpu.memory_space<vmem>>, vector<16x128xf32>
      %c0_10 = arith.constant 0 : index
      %c0_11 = arith.constant 0 : index
      %11 = vector.load %arg3[%c0_10, %c0_11] : memref<1x128xf32, #tpu.memory_space<vmem>>, vector<1x128xf32>
      %c0_12 = arith.constant 0 : index
      %c0_13 = arith.constant 0 : index
      %12 = vector.load %arg4[%c0_12, %c0_13] : memref<1x128xf32, #tpu.memory_space<vmem>>, vector<1x128xf32>
      %cst_14 = arith.constant dense<0.000000e+00> : vector<16xf32>
      %13 = vector.multi_reduction <add>, %10, %cst_14 [1] : vector<16x128xf32> to vector<16xf32>
      %14 = vector.shape_cast %13 : vector<16xf32> to vector<16x1xf32>
      %cst_15 = arith.constant 3.125000e-02 : f32
      %15 = vector.broadcast %cst_15 : f32 to vector<16x1xf32>
      %16 = arith.mulf %14, %15 : vector<16x1xf32>
      %17 = arith.mulf %10, %10 : vector<16x128xf32>
      %cst_16 = arith.constant dense<0.000000e+00> : vector<16xf32>
      %18 = vector.multi_reduction <add>, %17, %cst_16 [1] : vector<16x128xf32> to vector<16xf32>
      %19 = vector.shape_cast %18 : vector<16xf32> to vector<16x1xf32>
      %cst_17 = arith.constant 3.125000e-02 : f32
      %20 = vector.broadcast %cst_17 : f32 to vector<16x1xf32>
      %21 = arith.mulf %19, %20 : vector<16x1xf32>
      %22 = arith.mulf %16, %16 : vector<16x1xf32>
      %23 = arith.subf %21, %22 : vector<16x1xf32>
      %cst_18 = arith.constant 0.000000e+00 : f32
      %24 = vector.broadcast %cst_18 : f32 to vector<16x1xf32>
      %25 = arith.maximumf %23, %24 : vector<16x1xf32>
      %cst_19 = arith.constant 9.99999974E-6 : f32
      %26 = vector.broadcast %cst_19 : f32 to vector<16x1xf32>
      %27 = arith.addf %25, %26 : vector<16x1xf32>
      %28 = math.rsqrt %27 : vector<16x1xf32>
      %29 = vector.broadcast %16 : vector<16x1xf32> to vector<16x128xf32>
      %30 = arith.subf %10, %29 : vector<16x128xf32>
      %31 = vector.broadcast %28 : vector<16x1xf32> to vector<16x128xf32>
      %32 = arith.mulf %30, %31 : vector<16x128xf32>
      %33 = vector.broadcast %11 : vector<1x128xf32> to vector<16x128xf32>
      %34 = arith.mulf %32, %33 : vector<16x128xf32>
      %35 = vector.broadcast %12 : vector<1x128xf32> to vector<16x128xf32>
      %36 = arith.addf %34, %35 : vector<16x128xf32>
      %c0_20 = arith.constant 0 : index
      %c0_21 = arith.constant 0 : index
      %37 = vector.load %arg8[%c0_20, %c0_21] : memref<16x128xf32, #tpu.memory_space<vmem>>, vector<16x128xf32>
      tpu.vector_store %arg8[%c0_20, %c0_21], %36 {strides = array<i32>} : memref<16x128xf32, #tpu.memory_space<vmem>>, vector<16x128xf32>,
    } else {
    }
    %c0 = arith.constant 0 : index
    %c0_1 = arith.constant 0 : index
    %3 = vector.load %arg8[%c0, %c0_1] : memref<16x128xf32, #tpu.memory_space<vmem>>, vector<16x128xf32>
    %c0_2 = arith.constant 0 : index
    %c0_3 = arith.constant 0 : index
    %4 = vector.load %arg5[%c0_2, %c0_3] : memref<128x128xf32, #tpu.memory_space<vmem>>, vector<128x128xf32>
    %cst = arith.constant dense<0.000000e+00> : vector<16x128xf32>
    %5 = tpu.matmul %3, %4, %cst {dimension_numbers = #tpu.dot_dimension_numbers<[1], [0], [0], [1], [0, 0, 1, 1], [], []>} : vector<16x128xf32>, vector<128x128xf32>, vector<16x128xf32> -> vector<16x128xf32>
    %c0_4 = arith.constant 0 : index
    %c0_5 = arith.constant 0 : index
    %6 = vector.load %arg6[%c0_4, %c0_5] : memref<1x128xf32, #tpu.memory_space<vmem>>, vector<1x128xf32>
    %7 = vector.broadcast %6 : vector<1x128xf32> to vector<16x128xf32>
    %8 = arith.addf %5, %7 : vector<16x128xf32>
    %c0_6 = arith.constant 0 : index
    %c0_7 = arith.constant 0 : index
    %9 = vector.load %arg7[%c0_6, %c0_7] : memref<16x128xf32, #tpu.memory_space<vmem>>, vector<16x128xf32>
    tpu.vector_store %arg7[%c0_6, %c0_7], %8 {strides = array<i32>} : memref<16x128xf32, #tpu.memory_space<vmem>>, vector<16x128xf32>,
    return
  }
  func.func @transform_0(%arg0: i32, %arg1: i32) -> (i32, i32) {
    %c0_i32 = arith.constant 0 : i32
    %c0_i32_0 = arith.constant 0 : i32
    return %arg0, %c0_i32 : i32, i32
  }
  func.func @transform_1(%arg0: i32, %arg1: i32) -> (i32, i32) {
    %c0_i32 = arith.constant 0 : i32
    %c0_i32_0 = arith.constant 0 : i32
    %c0_i32_1 = arith.constant 0 : i32
    return %c0_i32, %c0_i32_0 : i32, i32
  }
  func.func @transform_2(%arg0: i32, %arg1: i32) -> (i32, i32) {
    %c0_i32 = arith.constant 0 : i32
    %c0_i32_0 = arith.constant 0 : i32
    %c0_i32_1 = arith.constant 0 : i32
    return %c0_i32, %c0_i32_0 : i32, i32
  }
  func.func @transform_3(%arg0: i32, %arg1: i32) -> (i32, i32) {
    %c0_i32 = arith.constant 0 : i32
    %c0_i32_0 = arith.constant 0 : i32
    return %c0_i32, %arg1 : i32, i32
  }
  func.func @transform_4(%arg0: i32, %arg1: i32) -> (i32, i32) {
    %c0_i32 = arith.constant 0 : i32
    %c0_i32_0 = arith.constant 0 : i32
    return %c0_i32, %arg1 : i32, i32
  }
  func.func @transform_5(%arg0: i32, %arg1: i32) -> (i32, i32) {
    %c0_i32 = arith.constant 0 : i32
    return %arg0, %arg1 : i32, i32
  }
}

</mosaic_0001>

<llo_original>
// kernel: tpu_custom_call.1
$region0: #{tpu_custom_call.1}
  #allocation0 [shape = 'u32[]', space=smem, size = 0x4, offset = 0x4, fixed_abs, tag = 'smem constant byte address 0x4 - core index']
  #allocation1 [shape = 'u32[144,128]{1,0:T(1,128)}', space=vmem, size = 0x12000, scoped, tag = 'internal scratch']
  #allocation2 [shape = 'f32[16,128]{1,0:T(8,128)}', space=vmem, size = 0x2000, scoped, tag = 'scratch operand']
  %s0 = inlined_call_operand.hbm [shape: f32[16,128], index: 0, kind: input, shape index: {}]
  %s1 = inlined_call_operand.vmem [shape: f32[1,128], index: 1, kind: input, shape index: {}]
  %s2 = inlined_call_operand.vmem [shape: f32[1,128], index: 2, kind: input, shape index: {}]
  %s3 = inlined_call_operand.hbm [shape: f32[128,128], index: 3, kind: input, shape index: {}]
  %s4 = inlined_call_operand.vmem [shape: f32[1,128], index: 4, kind: input, shape index: {}]
  %s5 = inlined_call_operand.hbm [shape: f32[16,128], index: 5, kind: output, shape index: {}]
  %s6 = sld [smem:[#allocation0]]
  $region42: #{tpu_custom_call.1} parent=0
    _
  %s8 = ssub.s32 1, %s6
  %s9 = scalar_select 0, %s8, %s6
  $region1: #{tpu_custom_call.1} parent=0
    #allocation3 [shape = 'u8[8192]{0}', space=vmem, size = 0x2000, scoped, tag = 'input window, operand 0, single buffered']
    #allocation4 [shape = 's32[1]{0}', space=sflag, size = 0x4, scoped, tag = 'scoped memory for tpu_custom_call.1']
    #allocation5 [shape = 's32[1]{0}', space=sflag, size = 0x4, scoped, tag = 'scoped memory for tpu_custom_call.1']
    #allocation6 [shape = 'u8[65536]{0}', space=vmem, size = 0x10000, scoped, tag = 'input window, operand 3, single buffered']
    #allocation7 [shape = 's32[1]{0}', space=sflag, size = 0x4, scoped, tag = 'scoped memory for tpu_custom_call.1']
    #allocation8 [shape = 'u8[8192]{0}', space=vmem, size = 0x2000, scoped, tag = 'output window, operand 0, single buffered']
    %10 = vsyncpa [#allocation4], 0
    %11 = vsyncpa [#allocation7], 0
    %12 = vsyncpa [#allocation5], 0
    // Predicated region
    $region2: #{tpu_custom_call.1} parent=1 // pred_check
      _
    $region3: #{tpu_custom_call.1} parent=1 // pred_check_branch
      %14 = sbr.rel (0) target = $region5
    $region4: #{tpu_custom_call.1} parent=1 // pred_region
      %s16 = ssub.s32 256, 256
      %17 = vsyncadd [#allocation4], %s16
      %s18 = sshll.u32 [#allocation3], 4
      %s19 = int_to_ptr.vmem [resolvable:$true] %s18
      %24 = dma.hbm_to_vmem [thread:$0]  %s0, 256, %s19, [#allocation4], 128, 128, 8
    $region5: #{tpu_custom_call.1} parent=1 // pred_fallthru
      _
    // Predicated region
    $region6: #{tpu_custom_call.1} parent=1 // pred_check
      _
    $region7: #{tpu_custom_call.1} parent=1 // pred_check_branch
      %26 = sbr.rel (0) target = $region9
    $region8: #{tpu_custom_call.1} parent=1 // pred_region
      _
    $region9: #{tpu_custom_call.1} parent=1 // pred_fallthru
      _
    // Predicated region
    $region10: #{tpu_custom_call.1} parent=1 // pred_check
      _
    $region11: #{tpu_custom_call.1} parent=1 // pred_check_branch
      %28 = sbr.rel (0) target = $region13
    $region12: #{tpu_custom_call.1} parent=1 // pred_region
      _
    $region13: #{tpu_custom_call.1} parent=1 // pred_fallthru
      _
    // Predicated region
    $region14: #{tpu_custom_call.1} parent=1 // pred_check
      _
    $region15: #{tpu_custom_call.1} parent=1 // pred_check_branch
      %30 = sbr.rel (0) target = $region17
    $region16: #{tpu_custom_call.1} parent=1 // pred_region
      %s32 = ssub.s32 2048, 2048
      %33 = vsyncadd [#allocation7], %s32
      %s34 = sshll.u32 [#allocation6], 4
      %s35 = int_to_ptr.vmem [resolvable:$true] %s34
      %40 = dma.hbm_to_vmem [thread:$0]  %s3, 2048, %s35, [#allocation7], 128, 128, 8
    $region17: #{tpu_custom_call.1} parent=1 // pred_fallthru
      _
    // Predicated region
    $region18: #{tpu_custom_call.1} parent=1 // pred_check
      _
    $region19: #{tpu_custom_call.1} parent=1 // pred_check_branch
      %42 = sbr.rel (0) target = $region21
    $region20: #{tpu_custom_call.1} parent=1 // pred_region
      _
    $region21: #{tpu_custom_call.1} parent=1 // pred_fallthru
      _
    // Predicated region
    $region22: #{tpu_custom_call.1} parent=1 // pred_check
      _
    $region23: #{tpu_custom_call.1} parent=1 // pred_check_branch
      %44 = sbr.rel (0) target = $region25
    $region24: #{tpu_custom_call.1} parent=1 // pred_region
      %45 = dma.done [#allocation4], 256
    $region25: #{tpu_custom_call.1} parent=1 // pred_fallthru
      _
    // Predicated region
    $region26: #{tpu_custom_call.1} parent=1 // pred_check
      _
    $region27: #{tpu_custom_call.1} parent=1 // pred_check_branch
      %47 = sbr.rel (0) target = $region29
    $region28: #{tpu_custom_call.1} parent=1 // pred_region
      %48 = dma.done [#allocation7], 2048
    $region29: #{tpu_custom_call.1} parent=1 // pred_fallthru
      _
    %p49 = scmp.eq.s32.totalorder 0, 0
    // Predicated region
    $region30: #{tpu_custom_call.1} parent=1 // pred_check
      %p50 = pneg %p49
    $region31: #{tpu_custom_call.1} parent=1 // pred_check_branch
      %52 = sbr.rel (%p50) target = $region33
    $region32: #{tpu_custom_call.1} parent=1 // pred_region
      %v53 = vld [vmem:[#allocation3] sm:$0xff]
      %v54 = vld [vmem:[#allocation3 + $0x8] sm:$0xff]
      %v55 = vld [vmem:[%s1] sm:$0x1]
      %v56 = vld [vmem:[%s2] sm:$0x1]
      %57 = vadd.xlane.f32.xlu0 %v53
      %v58 = vpop.xlane.xlu0 %57
      %59 = vadd.xlane.f32.xlu0 %v54
      %v60 = vpop.xlane.xlu0 %59
      %v61 = vmul.f32 %v58, 0.03125
      %v62 = vmul.f32 %v60, 0.03125
      %v63 = vmul.f32 %v53, %v53
      %v64 = vmul.f32 %v54, %v54
      %65 = vadd.xlane.f32.xlu0 %v63
      %v66 = vpop.xlane.xlu0 %65
      %67 = vadd.xlane.f32.xlu0 %v64
      %v68 = vpop.xlane.xlu0 %67
      %v69 = vmul.f32 %v66, 0.03125
      %v70 = vmul.f32 %v68, 0.03125
      %v71 = vmul.f32 %v61, %v61
      %v72 = vmul.f32 %v62, %v62
      %v73 = vsub.f32 %v69, %v71
      %v74 = vsub.f32 %v70, %v72
      %v75 = vmax.f32 %v73, 0.0
      %v76 = vmax.f32 %v74, 0.0
      %v77 = vadd.f32 %v75, 1e-05
      %v78 = vadd.f32 %v76, 1e-05
      %v79 = vrsqrt.pop %v77
      %v80 = vrsqrt.pop %v78
      %v81 = vsub.f32 %v53, %v61
      %v82 = vsub.f32 %v54, %v62
      %v83 = vmul.f32 %v81, %v79
      %v84 = vmul.f32 %v82, %v80
      %v86 = vlaneseq
      %v87 = vshrl.u32 %v86, 7
      %v88 = vsub.s32 0, %v87
      %v89 = vrot.slane %v55, %v88
      %v91 = vmul.f32 %v83, %v89
      %v92 = vmul.f32 %v84, %v89
      %v94 = vlaneseq
      %v95 = vshrl.u32 %v94, 7
      %v96 = vsub.s32 0, %v95
      %v97 = vrot.slane %v56, %v96
      %v99 = vadd.f32 %v91, %v97
      %v100 = vadd.f32 %v92, %v97
      %101 = vst [vmem:[#allocation2] sm:$0xff] %v99
      %102 = vst [vmem:[#allocation2 + $0x8] sm:$0xff] %v100
    $region33: #{tpu_custom_call.1} parent=1 // pred_fallthru
      _
    %v103 = vld [vmem:[#allocation2] sm:$0xff]
    %v104 = vld [vmem:[#allocation2 + $0x8] sm:$0xff]
    %v105 = vld [vmem:[#allocation6] sm:$0xff]
    %v106 = vld [vmem:[#allocation6 + $0x8] sm:$0xff]
    %v107 = vld [vmem:[#allocation6 + $0x10] sm:$0xff]
    %v108 = vld [vmem:[#allocation6 + $0x18] sm:$0xff]
    %v109 = vld [vmem:[#allocation6 + $0x20] sm:$0xff]
    %v110 = vld [vmem:[#allocation6 + $0x28] sm:$0xff]
    %v111 = vld [vmem:[#allocation6 + $0x30] sm:$0xff]
    %v112 = vld [vmem:[#allocation6 + $0x38] sm:$0xff]
    %v113 = vld [vmem:[#allocation6 + $0x40] sm:$0xff]
    %v114 = vld [vmem:[#allocation6 + $0x48] sm:$0xff]
    %v115 = vld [vmem:[#allocation6 + $0x50] sm:$0xff]
    %v116 = vld [vmem:[#allocation6 + $0x58] sm:$0xff]
    %v117 = vld [vmem:[#allocation6 + $0x60] sm:$0xff]
    %v118 = vld [vmem:[#allocation6 + $0x68] sm:$0xff]
    %v119 = vld [vmem:[#allocation6 + $0x70] sm:$0xff]
    %v120 = vld [vmem:[#allocation6 + $0x78] sm:$0xff]
    %v121 = vld [vmem:[%s4] sm:$0x1]
    %v123 = vlaneseq
    %v124 = vshrl.u32 %v123, 7
    %v125 = vsub.s32 0, %v124
    %v126 = vrot.slane %v121, %v125
    %128 = vmatprep.subr.mxu0 0.0
    %129 = vmatpush1.msra.mxu0 %v105
    %130 = vmatprep.subr.mxu0 0.0
    %131 = vmatpush1.msra.mxu0 %v106
    %132 = vmatprep.subr.mxu0 0.0
    %133 = vmatpush1.msra.mxu0 %v107
    %134 = vmatprep.subr.mxu0 0.0
    %135 = vmatpush1.msra.mxu0 %v108
    %136 = vmatprep.subr.mxu0 0.0
    %137 = vmatpush1.msra.mxu0 %v109
    %138 = vmatprep.subr.mxu0 0.0
    %139 = vmatpush1.msra.mxu0 %v110
    %140 = vmatprep.subr.mxu0 0.0
    %141 = vmatpush1.msra.mxu0 %v111
    %142 = vmatprep.subr.mxu0 0.0
    %143 = vmatpush1.msra.mxu0 %v112
    %144 = vmatprep.subr.mxu0 0.0
    %145 = vmatpush1.msra.mxu0 %v113
    %146 = vmatprep.subr.mxu0 0.0
    %147 = vmatpush1.msra.mxu0 %v114
    %148 = vmatprep.subr.mxu0 0.0
    %149 = vmatpush1.msra.mxu0 %v115
    %150 = vmatprep.subr.mxu0 0.0
    %151 = vmatpush1.msra.mxu0 %v116
    %152 = vmatprep.subr.mxu0 0.0
    %153 = vmatpush1.msra.mxu0 %v117
    %154 = vmatprep.subr.mxu0 0.0
    %155 = vmatpush1.msra.mxu0 %v118
    %156 = vmatprep.subr.mxu0 0.0
    %157 = vmatpush1.msra.mxu0 %v119
    %158 = vmatprep.subr.mxu0 0.0
    %159 = vmatpush1.msra.mxu0 %v120
    %160 = vmatprep.subr.mxu0 0.0
    %161 = vmatpush1.msra.mxu0 0.0
    %162 = vmatprep.subr.mxu0 0.0
    %163 = vmatpush1.msra.mxu0 0.0
    %164 = vmatprep.subr.mxu0 0.0
    %165 = vmatpush1.msra.mxu0 0.0
    %166 = vmatprep.subr.mxu0 0.0
    %167 = vmatpush1.msra.mxu0 0.0
    %168 = vmatprep.subr.mxu0 0.0
    %169 = vmatpush1.msra.mxu0 0.0
    %170 = vmatprep.subr.mxu0 0.0
    %171 = vmatpush1.msra.mxu0 0.0
    %172 = vmatprep.subr.mxu0 0.0
    %173 = vmatpush1.msra.mxu0 0.0
    %174 = vmatprep.subr.mxu0 0.0
    %175 = vmatpush1.msra.mxu0 0.0
    %176 = vmatprep.subr.mxu0 0.0
    %177 = vmatpush1.msra.mxu0 0.0
    %178 = vmatprep.subr.mxu0 0.0
    %179 = vmatpush1.msra.mxu0 0.0
    %180 = vmatprep.subr.mxu0 0.0
    %181 = vmatpush1.msra.mxu0 0.0
    %182 = vmatprep.subr.mxu0 0.0
    %183 = vmatpush1.msra.mxu0 0.0
    %184 = vmatprep.subr.mxu0 0.0
    %185 = vmatpush1.msra.mxu0 0.0
    %186 = vmatprep.subr.mxu0 0.0
    %187 = vmatpush1.msra.mxu0 0.0
    %188 = vmatprep.subr.mxu0 0.0
    %189 = vmatpush1.msra.mxu0 0.0
    %190 = vmatprep.subr.mxu0 0.0
    %191 = vmatpush1.msra.mxu0 0.0
    %192 = vmatprep.mubr.f32.mxu0 0.0
    %193 = vmatmul.mubr.f32.gmra.mrb[0].mxu0 %v103
    %v194 = vpop.f32.mrb[0].mxu0
    %v195 = vadd.f32 %v126, %v194
    %v196 = vpop.f32.mrb[0].mxu0
    %197 = vmatprep.mubr.f32.mxu0 0.0
    %198 = vmatmul.mubr.f32.gmra.mrb[0].mxu0 %v104
    %v199 = vpop.f32.mrb[0].mxu0
    %v200 = vadd.f32 %v126, %v199
    %v201 = vpop.f32.mrb[0].mxu0
    %202 = vdwg.mxu0
    %203 = vst [vmem:[#allocation8] sm:$0xff] %v195
    %204 = vst [vmem:[#allocation8 + $0x8] sm:$0xff] %v200
    // Predicated region
    $region34: #{tpu_custom_call.1} parent=1 // pred_check
      _
    $region35: #{tpu_custom_call.1} parent=1 // pred_check_branch
      %206 = sbr.rel (0) target = $region37
    $region36: #{tpu_custom_call.1} parent=1 // pred_region
      %s208 = ssub.s32 256, 256
      %209 = vsyncadd [#allocation5], %s208
      %s210 = sshll.u32 [#allocation8], 4
      %s211 = int_to_ptr.vmem [resolvable:$true] %s210
      %216 = dma.vmem_to_hbm [thread:$0]  %s211, 256, %s5, [#allocation5], 128, 128, 8
    $region37: #{tpu_custom_call.1} parent=1 // pred_fallthru
      _
    // Predicated region
    $region38: #{tpu_custom_call.1} parent=1 // pred_check
      _
    $region39: #{tpu_custom_call.1} parent=1 // pred_check_branch
      %218 = sbr.rel (0) target = $region41
    $region40: #{tpu_custom_call.1} parent=1 // pred_region
      %219 = dma.done [#allocation5], 256
    $region41: #{tpu_custom_call.1} parent=1 // pred_fallthru
      _
    %220 = vsyncpa [#allocation4], 1
    %221 = vsyncpa [#allocation7], 1
    %222 = vsyncpa [#allocation5], 1

</llo_original>
